<compile_context>
chip_gen: v6e
topology: v6e:2x2x1
jax: 0.10.0
libtpu: 0.0.40
codegen_flags: <defaults>
</compile_context>

<pallas_src>
import functools

import jax
import jax.numpy as jnp
from jax.experimental import pallas as pl
from jax.experimental.pallas import tpu as pltpu


def _round_up(x, m):
    return (x + m - 1) // m * m


def _pick_block_b(batch):
    """Large batch tiles, 8-aligned, but keep >=2 grid steps when possible
    (v7x has 2 TensorCores that only engage if the parallel axis has >1 step)."""
    if batch <= 16:
        return _round_up(max(batch, 8), 8)
    return min(512, _round_up((batch + 1) // 2, 8))


def _cls_head_kernel(x_ref, w1_ref, b1_ref, w2_ref, b2_ref, out_ref):
    # x_ref: (tb, D_in_p) bf16/f32; weights resident in VMEM across the grid.
    x = x_ref[...]
    h = jnp.tanh(
        jnp.dot(x, w1_ref[...], preferred_element_type=jnp.float32)
        + b1_ref[...]
    )                                                               # (tb, D_h_p) f32
    logits = (
        jnp.dot(h.astype(w2_ref.dtype), w2_ref[...],
                preferred_element_type=jnp.float32)
        + b2_ref[...]                                               # padded cols = -inf
    )                                                               # (tb, L_p) f32
    m = jnp.max(logits, axis=-1, keepdims=True)                     # finite (real cols)
    e = jnp.exp(logits - m)                                         # padded cols -> 0
    denom = jnp.sum(e, axis=-1, keepdims=True)
    out_ref[...] = (e * pl.reciprocal(denom, approx=True)).astype(out_ref.dtype)


@functools.partial(jax.jit, static_argnames=("block_b", "use_bf16"))
def bert_classification_head(x, w1_t, b1, w2_t, b2, *, block_b=None, use_bf16=True):
    """x: [B, D_in]; w1_t: [D_in, D_h]; b1: [D_h]; w2_t: [D_h, L]; b2: [L]."""
    B, D_in = x.shape
    D_h = w1_t.shape[1]
    L = w2_t.shape[1]

    # Lane-dense padded sizes (no-op when already 128-aligned).
    D_in_p = _round_up(D_in, 128)
    D_h_p = _round_up(D_h, 128)
    L_p = _round_up(L, 128)

    if block_b is None:
        block_b = _pick_block_b(B)
    B_p = _round_up(B, block_b)

    cdt = jnp.bfloat16 if use_bf16 else jnp.float32

    # Zero-pad inputs/weights; pad b2 with -inf so padded logits exp to 0.
    x_p = jnp.pad(x.astype(cdt), ((0, B_p - B), (0, D_in_p - D_in)))
    w1_p = jnp.pad(w1_t.astype(cdt), ((0, D_in_p - D_in), (0, D_h_p - D_h)))
    b1_p = jnp.pad(b1.reshape(1, -1).astype(jnp.float32), ((0, 0), (0, D_h_p - D_h)))
    w2_p = jnp.pad(w2_t.astype(cdt), ((0, D_h_p - D_h), (0, L_p - L)))
    b2_p = jnp.pad(b2.reshape(1, -1).astype(jnp.float32), ((0, 0), (0, L_p - L)),
                   constant_values=-jnp.inf)

    grid = (B_p // block_b,)
    itemsize = jnp.dtype(cdt).itemsize
    cost = pl.CostEstimate(
        flops=2 * B_p * D_in_p * D_h_p + 2 * B_p * D_h_p * L_p,
        transcendentals=B_p * (D_h_p + L_p),
        bytes_accessed=(B_p * D_in_p * itemsize
                        + D_in_p * D_h_p * itemsize + D_h_p * L_p * itemsize
                        + 4 * (D_h_p + L_p)
                        + 4 * B_p * L_p),
    )

    out_p = pl.pallas_call(
        _cls_head_kernel,
        out_shape=jax.ShapeDtypeStruct((B_p, L_p), jnp.float32),
        grid_spec=pltpu.PrefetchScalarGridSpec(
            num_scalar_prefetch=0,
            grid=grid,
            in_specs=[
                pl.BlockSpec((block_b, D_in_p), lambda i: (i, 0)),  # x tile
                pl.BlockSpec((D_in_p, D_h_p), lambda i: (0, 0)),    # W1^T (resident)
                pl.BlockSpec((1, D_h_p), lambda i: (0, 0)),         # b1
                pl.BlockSpec((D_h_p, L_p), lambda i: (0, 0)),       # W2^T (resident)
                pl.BlockSpec((1, L_p), lambda i: (0, 0)),           # b2 (-inf padded)
            ],
            out_specs=pl.BlockSpec((block_b, L_p), lambda i: (i, 0)),
        ),
        compiler_params=pltpu.CompilerParams(
            dimension_semantics=("parallel",),
            # Tiles here are small; raise vmem_limit_bytes for very large
            # D_in/D_h (re-derive against 64 MiB physical VMEM on v7x).
        ),
        cost_estimate=cost,
    )(x_p, w1_p, b1_p, w2_p, b2_p)

    return out_p[:B, :L]


if __name__ == "__main__":
    # Small shapes consistent with the module:
    #   input_size=32, dim_hidden=32, num_labels=4, batch=32
    B, D_IN, D_H, L = 32, 32, 32, 4

    key = jax.random.PRNGKey(0)
    kx, kw1, kb1, kw2, kb2 = jax.random.split(key, 5)

    x = jax.random.normal(kx, (B, D_IN), dtype=jnp.float32)

    # PyTorch Linear stores [out, in]; kernel takes the transposed [in, out].
    w1 = jax.random.normal(kw1, (D_H, D_IN), dtype=jnp.float32) * 0.05
    b1 = jax.random.normal(kb1, (D_H,), dtype=jnp.float32) * 0.05
    w2 = jax.random.normal(kw2, (L, D_H), dtype=jnp.float32) * 0.05
    b2 = jax.random.normal(kb2, (L,), dtype=jnp.float32) * 0.05

    out = bert_classification_head(x, w1.T, b1, w2.T, b2)
    out = jax.block_until_ready(out)
    assert out.shape == (B, L)

    # Reference 1: same math with bf16 matmul operands (tight tolerance).
    xb, w1b, w2b = (x.astype(jnp.bfloat16), w1.T.astype(jnp.bfloat16),
                    w2.T.astype(jnp.bfloat16))
    h_b = jnp.tanh(jnp.dot(xb, w1b, preferred_element_type=jnp.float32) + b1)
    logits_b = jnp.dot(h_b.astype(jnp.bfloat16), w2b,
                       preferred_element_type=jnp.float32) + b2
    ref_b = jax.nn.softmax(logits_b, axis=-1)
    assert jnp.allclose(out, ref_b, atol=5e-3, rtol=5e-3)

    # Reference 2: full-f32 math of the PyTorch module in eval mode (loose
    # tolerance — bf16 matmul operands).
    h_ref = jnp.tanh(x @ w1.T + b1)
    ref = jax.nn.softmax(h_ref @ w2.T + b2, axis=-1)
    assert jnp.allclose(out, ref, atol=2e-2, rtol=2e-2)

    # Rows are valid probability distributions.
    assert jnp.allclose(jnp.sum(out, axis=-1), 1.0, atol=5e-3)

    print("KERNEL_OK")
</pallas_src>

<mosaic_0001>
module attributes {stable_mosaic.version = 11 : i64} {
  func.func @_cls_head_kernel(%arg0: i32, %arg1: memref<16x128xbf16, #tpu.memory_space<vmem>>, %arg2: memref<128x128xbf16, #tpu.memory_space<vmem>>, %arg3: memref<1x128xf32, #tpu.memory_space<vmem>>, %arg4: memref<128x128xbf16, #tpu.memory_space<vmem>>, %arg5: memref<1x128xf32, #tpu.memory_space<vmem>>, %arg6: memref<16x128xf32, #tpu.memory_space<vmem>>) attributes {dimension_semantics = [#tpu.dimension_semantics<parallel>], iteration_bounds = array<i64: 2>, scalar_prefetch = 0 : i64, scratch_operands = 0 : i64, tpu.core_type = #tpu.core_type<tc>, window_params = [{transform_indices = @transform_0, window_bounds = array<i64: 16, 128>}, {pipeline_mode = #tpu.pipeline_mode<synchronous>, transform_indices = @transform_1, window_bounds = array<i64: 128, 128>}, {pipeline_mode = #tpu.pipeline_mode<synchronous>, transform_indices = @transform_2, window_bounds = array<i64: 1, 128>}, {pipeline_mode = #tpu.pipeline_mode<synchronous>, transform_indices = @transform_3, window_bounds = array<i64: 128, 128>}, {pipeline_mode = #tpu.pipeline_mode<synchronous>, transform_indices = @transform_4, window_bounds = array<i64: 1, 128>}, {transform_indices = @transform_5, window_bounds = array<i64: 16, 128>}]} {
    %c0 = arith.constant 0 : index
    %c0_0 = arith.constant 0 : index
    %0 = vector.load %arg1[%c0, %c0_0] : memref<16x128xbf16, #tpu.memory_space<vmem>>, vector<16x128xbf16>
    %c0_1 = arith.constant 0 : index
    %c0_2 = arith.constant 0 : index
    %1 = vector.load %arg2[%c0_1, %c0_2] : memref<128x128xbf16, #tpu.memory_space<vmem>>, vector<128x128xbf16>
    %cst = arith.constant dense<0.000000e+00> : vector<16x128xf32>
    %2 = tpu.matmul %0, %1, %cst {dimension_numbers = #tpu.dot_dimension_numbers<[1], [0], [0], [1], [0, 0, 1, 1], [], []>} : vector<16x128xbf16>, vector<128x128xbf16>, vector<16x128xf32> -> vector<16x128xf32>
    %c0_3 = arith.constant 0 : index
    %c0_4 = arith.constant 0 : index
    %3 = vector.load %arg3[%c0_3, %c0_4] : memref<1x128xf32, #tpu.memory_space<vmem>>, vector<1x128xf32>
    %4 = vector.broadcast %3 : vector<1x128xf32> to vector<16x128xf32>
    %5 = arith.addf %2, %4 : vector<16x128xf32>
    %6 = math.tanh %5 : vector<16x128xf32>
    %7 = arith.truncf %6 : vector<16x128xf32> to vector<16x128xbf16>
    %c0_5 = arith.constant 0 : index
    %c0_6 = arith.constant 0 : index
    %8 = vector.load %arg4[%c0_5, %c0_6] : memref<128x128xbf16, #tpu.memory_space<vmem>>, vector<128x128xbf16>
    %cst_7 = arith.constant dense<0.000000e+00> : vector<16x128xf32>
    %9 = tpu.matmul %7, %8, %cst_7 {dimension_numbers = #tpu.dot_dimension_numbers<[1], [0], [0], [1], [0, 0, 1, 1], [], []>} : vector<16x128xbf16>, vector<128x128xbf16>, vector<16x128xf32> -> vector<16x128xf32>
    %c0_8 = arith.constant 0 : index
    %c0_9 = arith.constant 0 : index
    %10 = vector.load %arg5[%c0_8, %c0_9] : memref<1x128xf32, #tpu.memory_space<vmem>>, vector<1x128xf32>
    %11 = vector.broadcast %10 : vector<1x128xf32> to vector<16x128xf32>
    %12 = arith.addf %9, %11 : vector<16x128xf32>
    %cst_10 = arith.constant dense<0xFF800000> : vector<16xf32>
    %13 = vector.multi_reduction <maximumf>, %12, %cst_10 [1] : vector<16x128xf32> to vector<16xf32>
    %14 = vector.shape_cast %13 : vector<16xf32> to vector<16x1xf32>
    %15 = vector.broadcast %14 : vector<16x1xf32> to vector<16x128xf32>
    %16 = arith.subf %12, %15 : vector<16x128xf32>
    %17 = math.exp %16 : vector<16x128xf32>
    %cst_11 = arith.constant dense<0.000000e+00> : vector<16xf32>
    %18 = vector.multi_reduction <add>, %17, %cst_11 [1] : vector<16x128xf32> to vector<16xf32>
    %19 = vector.shape_cast %18 : vector<16xf32> to vector<16x1xf32>
    %20 = tpu.reciprocal %19 {approx = true} : vector<16x1xf32> -> vector<16x1xf32>
    %21 = vector.broadcast %20 : vector<16x1xf32> to vector<16x128xf32>
    %22 = arith.mulf %17, %21 : vector<16x128xf32>
    %c0_12 = arith.constant 0 : index
    %c0_13 = arith.constant 0 : index
    %23 = vector.load %arg6[%c0_12, %c0_13] : memref<16x128xf32, #tpu.memory_space<vmem>>, vector<16x128xf32>
    tpu.vector_store %arg6[%c0_12, %c0_13], %22 {strides = array<i32>} : memref<16x128xf32, #tpu.memory_space<vmem>>, vector<16x128xf32>,
    return
  }
  func.func @transform_0(%arg0: i32) -> (i32, i32) {
    %c0_i32 = arith.constant 0 : i32
    %c0_i32_0 = arith.constant 0 : i32
    return %arg0, %c0_i32 : i32, i32
  }
  func.func @transform_1(%arg0: i32) -> (i32, i32) {
    %c0_i32 = arith.constant 0 : i32
    %c0_i32_0 = arith.constant 0 : i32
    %c0_i32_1 = arith.constant 0 : i32
    return %c0_i32, %c0_i32_0 : i32, i32
  }
  func.func @transform_2(%arg0: i32) -> (i32, i32) {
    %c0_i32 = arith.constant 0 : i32
    %c0_i32_0 = arith.constant 0 : i32
    %c0_i32_1 = arith.constant 0 : i32
    return %c0_i32, %c0_i32_0 : i32, i32
  }
  func.func @transform_3(%arg0: i32) -> (i32, i32) {
    %c0_i32 = arith.constant 0 : i32
    %c0_i32_0 = arith.constant 0 : i32
    %c0_i32_1 = arith.constant 0 : i32
    return %c0_i32, %c0_i32_0 : i32, i32
  }
  func.func @transform_4(%arg0: i32) -> (i32, i32) {
    %c0_i32 = arith.constant 0 : i32
    %c0_i32_0 = arith.constant 0 : i32
    %c0_i32_1 = arith.constant 0 : i32
    return %c0_i32, %c0_i32_0 : i32, i32
  }
  func.func @transform_5(%arg0: i32) -> (i32, i32) {
    %c0_i32 = arith.constant 0 : i32
    %c0_i32_0 = arith.constant 0 : i32
    return %arg0, %c0_i32 : i32, i32
  }
}

</mosaic_0001>

<llo_original>
// kernel: bert_classification_head.1
$region0: #{bert_classification_head.1}
  #allocation0 [shape = 'u32[]', space=smem, size = 0x4, offset = 0x4, fixed_abs, tag = 'smem constant byte address 0x4 - core index']
  #allocation1 [shape = 'u32[144,128]{1,0:T(1,128)}', space=vmem, size = 0x12000, scoped, tag = 'internal scratch']
  %s0 = inlined_call_operand.vmem [shape: bf16[32,128], index: 0, kind: input, shape index: {}]
  %s1 = inlined_call_operand.vmem [shape: bf16[128,128], index: 1, kind: input, shape index: {}]
  %s2 = inlined_call_operand.vmem [shape: f32[1,128], index: 2, kind: input, shape index: {}]
  %s3 = inlined_call_operand.vmem [shape: bf16[128,128], index: 3, kind: input, shape index: {}]
  %s4 = inlined_call_operand.vmem [shape: f32[1,128], index: 4, kind: input, shape index: {}]
  %s5 = inlined_call_operand.vmem [shape: f32[32,128], index: 5, kind: output, shape index: {}]
  %s6 = sld [smem:[#allocation0]]
  $region53: #{bert_classification_head.1} parent=0
    _
  %s8 = ssub.s32 1, %s6
  %s9 = scalar_select 0, %s8, %s6
  loop: start=0, step=1, limit=4
  $region2: #{bert_classification_head.1} parent=0 // loop_pre_header
    _
  $region3: #{bert_classification_head.1} parent=0 // loop_header
    %s11 = sphi 0, %s15
    %p12 = scmp.ge.s32.totalorder %s11, 4
    %s21 = sphi 0, %s23
    %s24 = sphi 0, %s21
    %s25 = sphi 0, %s24
    %s41 = sphi 0, %s25
    %s45 = sphi 0, %s45
    %s47 = sphi 0, %s45
    %s48 = sphi 0, %s47
    %s62 = sphi 0, %s48
    %s66 = sphi 0, %s66
    %s68 = sphi 0, %s66
    %s69 = sphi 0, %s68
    %s83 = sphi 0, %s69
    %s87 = sphi 0, %s87
    %s89 = sphi 0, %s87
    %s90 = sphi 0, %s89
    %s104 = sphi 0, %s90
    %s108 = sphi 0, %s108
    %s110 = sphi 0, %s108
    %s111 = sphi 0, %s110
    %s125 = sphi 0, %s111
    %s131 = sphi 0, %s133
    %s134 = sphi 0, %s131
    %s135 = sphi 0, %s134
    %s151 = sphi 0, %s135
  $region4: #{bert_classification_head.1} parent=0 // loop_header_branch
    %14 = sbr.rel (%p12) target = $region8
  $region5: #{bert_classification_head.1} parent=0 // loop_body
    %s16 = ssub.s32 %s11, 1
    %s17 = ssub.s32 %s11, 2
    %s18 = sadd.s32 %s11, 1
    %s19 = ssub.s32 %s11, %s18
    %p20 = scmp.eq.s32.totalorder %s19, 0
    %s22 = sadd.s32 %s21, 1
    %s23 = scalar_select %p20, %s21, %s22
    %p26 = pneg %p20
    %p27 = scmp.eq.s32.totalorder %s11, 1
    %p28 = por %p26, %p27
    %p29 = scmp.ne.s32.totalorder %s21, %s24
    %p30 = scmp.eq.s32.totalorder %s11, 0
    %p31 = por %p29, %p30
    %p32 = scmp.ne.s32.totalorder %s21, %s24
    %p33 = scmp.eq.s32.totalorder %s16, 1
    %p34 = por %p32, %p33
    %p35 = scmp.ne.s32.totalorder %s24, %s25
    %p36 = scmp.eq.s32.totalorder %s16, 0
    %p37 = por %p35, %p36
    %p38 = scmp.ne.s32.totalorder %s24, %s25
    %p39 = scmp.eq.s32.totalorder %s17, 1
    %p40 = por %p38, %p39
    %p42 = scmp.ne.s32.totalorder %s25, %s41
    %p43 = scmp.eq.s32.totalorder %s17, 0
    %p44 = por %p42, %p43
    %s46 = sadd.s32 %s45, 1
    %p49 = scmp.eq.s32.totalorder %s11, 1
    %p50 = scmp.ne.s32.totalorder %s45, %s47
    %p51 = scmp.eq.s32.totalorder %s11, 0
    %p52 = por %p50, %p51
    %p53 = scmp.ne.s32.totalorder %s45, %s47
    %p54 = scmp.eq.s32.totalorder %s16, 1
    %p55 = por %p53, %p54
    %p56 = scmp.ne.s32.totalorder %s47, %s48
    %p57 = scmp.eq.s32.totalorder %s16, 0
    %p58 = por %p56, %p57
    %p59 = scmp.ne.s32.totalorder %s47, %s48
    %p60 = scmp.eq.s32.totalorder %s17, 1
    %p61 = por %p59, %p60
    %p63 = scmp.ne.s32.totalorder %s48, %s62
    %p64 = scmp.eq.s32.totalorder %s17, 0
    %p65 = por %p63, %p64
    %s67 = sadd.s32 %s66, 1
    %p70 = scmp.eq.s32.totalorder %s11, 1
    %p71 = scmp.ne.s32.totalorder %s66, %s68
    %p72 = scmp.eq.s32.totalorder %s11, 0
    %p73 = por %p71, %p72
    %p74 = scmp.ne.s32.totalorder %s66, %s68
    %p75 = scmp.eq.s32.totalorder %s16, 1
    %p76 = por %p74, %p75
    %p77 = scmp.ne.s32.totalorder %s68, %s69
    %p78 = scmp.eq.s32.totalorder %s16, 0
    %p79 = por %p77, %p78
    %p80 = scmp.ne.s32.totalorder %s68, %s69
    %p81 = scmp.eq.s32.totalorder %s17, 1
    %p82 = por %p80, %p81
    %p84 = scmp.ne.s32.totalorder %s69, %s83
    %p85 = scmp.eq.s32.totalorder %s17, 0
    %p86 = por %p84, %p85
    %s88 = sadd.s32 %s87, 1
    %p91 = scmp.eq.s32.totalorder %s11, 1
    %p92 = scmp.ne.s32.totalorder %s87, %s89
    %p93 = scmp.eq.s32.totalorder %s11, 0
    %p94 = por %p92, %p93
    %p95 = scmp.ne.s32.totalorder %s87, %s89
    %p96 = scmp.eq.s32.totalorder %s16, 1
    %p97 = por %p95, %p96
    %p98 = scmp.ne.s32.totalorder %s89, %s90
    %p99 = scmp.eq.s32.totalorder %s16, 0
    %p100 = por %p98, %p99
    %p101 = scmp.ne.s32.totalorder %s89, %s90
    %p102 = scmp.eq.s32.totalorder %s17, 1
    %p103 = por %p101, %p102
    %p105 = scmp.ne.s32.totalorder %s90, %s104
    %p106 = scmp.eq.s32.totalorder %s17, 0
    %p107 = por %p105, %p106
    %s109 = sadd.s32 %s108, 1
    %p112 = scmp.eq.s32.totalorder %s11, 1
    %p113 = scmp.ne.s32.totalorder %s108, %s110
    %p114 = scmp.eq.s32.totalorder %s11, 0
    %p115 = por %p113, %p114
    %p116 = scmp.ne.s32.totalorder %s108, %s110
    %p117 = scmp.eq.s32.totalorder %s16, 1
    %p118 = por %p116, %p117
    %p119 = scmp.ne.s32.totalorder %s110, %s111
    %p120 = scmp.eq.s32.totalorder %s16, 0
    %p121 = por %p119, %p120
    %p122 = scmp.ne.s32.totalorder %s110, %s111
    %p123 = scmp.eq.s32.totalorder %s17, 1
    %p124 = por %p122, %p123
    %p126 = scmp.ne.s32.totalorder %s111, %s125
    %p127 = scmp.eq.s32.totalorder %s17, 0
    %p128 = por %p126, %p127
    %s129 = ssub.s32 %s11, %s18
    %p130 = scmp.eq.s32.totalorder %s129, 0
    %s132 = sadd.s32 %s131, 1
    %s133 = scalar_select %p130, %s131, %s132
    %p136 = pneg %p130
    %p137 = scmp.eq.s32.totalorder %s11, 1
    %p138 = por %p136, %p137
    %p139 = scmp.ne.s32.totalorder %s131, %s134
    %p140 = scmp.eq.s32.totalorder %s11, 0
    %p141 = por %p139, %p140
    %p142 = scmp.ne.s32.totalorder %s131, %s134
    %p143 = scmp.eq.s32.totalorder %s16, 1
    %p144 = por %p142, %p143
    %p145 = scmp.ne.s32.totalorder %s134, %s135
    %p146 = scmp.eq.s32.totalorder %s16, 0
    %p147 = por %p145, %p146
    %p148 = scmp.ne.s32.totalorder %s134, %s135
    %p149 = scmp.eq.s32.totalorder %s17, 1
    %p150 = por %p148, %p149
    %p152 = scmp.ne.s32.totalorder %s135, %s151
    %p153 = scmp.eq.s32.totalorder %s17, 0
    %p154 = por %p152, %p153
    %p155 = scmp.le.s32.totalorder 1, %s11
    %p156 = scmp.lt.s32.totalorder %s11, 3
    %p157 = pnand %p155, %p156
    %p158 = pneg %p157
    // Predicated region
    $region9: #{bert_classification_head.1} parent=5 // pred_check
      _
    $region10: #{bert_classification_head.1} parent=5 // pred_check_branch
      %160 = sbr.rel (%p157) target = $region12
    $region11: #{bert_classification_head.1} parent=5 // pred_region
      %s161 = ssub.s32 %s11, 1
      // Predicated region
      $region13: #{bert_classification_head.1} parent=11 // pred_check
        %p162 = pneg %p58
      $region14: #{bert_classification_head.1} parent=11 // pred_check_branch
        %164 = sbr.rel (%p162) target = $region16
      $region15: #{bert_classification_head.1} parent=11 // pred_region
        _
      $region16: #{bert_classification_head.1} parent=11 // pred_fallthru
        _
      // Predicated region
      $region17: #{bert_classification_head.1} parent=11 // pred_check
        %p165 = pneg %p79
      $region18: #{bert_classification_head.1} parent=11 // pred_check_branch
        %167 = sbr.rel (%p165) target = $region20
      $region19: #{bert_classification_head.1} parent=11 // pred_region
        _
      $region20: #{bert_classification_head.1} parent=11 // pred_fallthru
        _
      // Predicated region
      $region21: #{bert_classification_head.1} parent=11 // pred_check
        %p168 = pneg %p100
      $region22: #{bert_classification_head.1} parent=11 // pred_check_branch
        %170 = sbr.rel (%p168) target = $region24
      $region23: #{bert_classification_head.1} parent=11 // pred_region
        _
      $region24: #{bert_classification_head.1} parent=11 // pred_fallthru
        _
      // Predicated region
      $region25: #{bert_classification_head.1} parent=11 // pred_check
        %p171 = pneg %p121
      $region26: #{bert_classification_head.1} parent=11 // pred_check_branch
        %173 = sbr.rel (%p171) target = $region28
      $region27: #{bert_classification_head.1} parent=11 // pred_region
        _
      $region28: #{bert_classification_head.1} parent=11 // pred_fallthru
        _
    $region12: #{bert_classification_head.1} parent=5 // pred_fallthru
      _
    %p174 = scmp.lt.s32.totalorder %s11, 2
    // Predicated region
    $region29: #{bert_classification_head.1} parent=5 // pred_check
      %p175 = pneg %p174
    $region30: #{bert_classification_head.1} parent=5 // pred_check_branch
      %177 = sbr.rel (%p175) target = $region32
    $region31: #{bert_classification_head.1} parent=5 // pred_region
      // Predicated region
      $region33: #{bert_classification_head.1} parent=31 // pred_check
        %p178 = pneg %p31
      $region34: #{bert_classification_head.1} parent=31 // pred_check_branch
        %180 = sbr.rel (%p178) target = $region36
      $region35: #{bert_classification_head.1} parent=31 // pred_region
        %s181 = smul.u32 2, %s11
        %p182 = scmp.lt.s32.totalorder %s181, 3
        %s183 = scalar_select %p182, %s181, 3
        %s184 = smul.addr %s183, 4
        %s185 = scalar_lea.vmem %s0, %s184
        %s186 = smul.u32 2, %s11
      $region36: #{bert_classification_head.1} parent=31 // pred_fallthru
        _
    $region32: #{bert_classification_head.1} parent=5 // pred_fallthru
      _
    %p187 = scmp.le.s32.totalorder 1, %s11
    %p188 = scmp.lt.s32.totalorder %s11, 3
    %p189 = pnand %p187, %p188
    %p190 = pneg %p189
    // Predicated region
    $region37: #{bert_classification_head.1} parent=5 // pred_check
      _
    $region38: #{bert_classification_head.1} parent=5 // pred_check_branch
      %192 = sbr.rel (%p189) target = $region40
    $region39: #{bert_classification_head.1} parent=5 // pred_region
      %s193 = ssub.s32 %s11, 1
      %s194 = smul.u32 2, %s16
      %p195 = scmp.lt.s32.totalorder %s194, 3
      %s196 = scalar_select %p195, %s194, 3
      %s197 = smul.addr %s196, 4
      %s198 = scalar_lea.vmem %s0, %s197
      %p199 = pneg %p37
      %p200 = pneg %p34
      %p201 = pneg %p58
      %p202 = pneg %p55
      %p203 = pneg %p79
      %p204 = pneg %p76
      %p205 = pneg %p100
      %p206 = pneg %p97
      %p207 = pneg %p121
      %p208 = pneg %p118
      %p209 = pneg %p147
      %p210 = pneg %p144
      %s211 = smul.u32 2, %s16
      %p212 = scmp.lt.s32.totalorder %s211, 3
      %s213 = scalar_select %p212, %s211, 3
      %s214 = smul.addr %s213, 8
      %s215 = scalar_lea.vmem %s5, %s214
      %s216 = smul.u32 2, %s16
      %p217 = scmp.lt.s32.totalorder %s216, 3
      %s218 = scalar_select %p217, %s216, 3
      %s219 = smul.addr %s218, 4
      %s220 = scalar_lea.vmem %s0, %s219
      %s221 = smul.u32 2, %s16
      %s222 = smul.u32 2, %s16
      %p223 = scmp.lt.s32.totalorder %s222, 3
      %s224 = scalar_select %p223, %s222, 3
      %s225 = smul.addr %s224, 8
      %s226 = scalar_lea.vmem %s5, %s225
      %s227 = smul.u32 2, %s16
      %v229 = vld [vmem:[%s220] sm:$0xf]
      %v230 = vld [vmem:[%s220 + $0x4] sm:$0xf]
      %v231 = vld [vmem:[%s1] sm:$0xf]
      %v232 = vld [vmem:[%s1 + $0x4] sm:$0xf]
      %v233 = vld [vmem:[%s1 + $0x8] sm:$0xf]
      %v234 = vld [vmem:[%s1 + $0xc] sm:$0xf]
      %v235 = vld [vmem:[%s1 + $0x10] sm:$0xf]
      %v236 = vld [vmem:[%s1 + $0x14] sm:$0xf]
      %v237 = vld [vmem:[%s1 + $0x18] sm:$0xf]
      %v238 = vld [vmem:[%s1 + $0x1c] sm:$0xf]
      %v239 = vld [vmem:[%s1 + $0x20] sm:$0xf]
      %v240 = vld [vmem:[%s1 + $0x24] sm:$0xf]
      %v241 = vld [vmem:[%s1 + $0x28] sm:$0xf]
      %v242 = vld [vmem:[%s1 + $0x2c] sm:$0xf]
      %v243 = vld [vmem:[%s1 + $0x30] sm:$0xf]
      %v244 = vld [vmem:[%s1 + $0x34] sm:$0xf]
      %v245 = vld [vmem:[%s1 + $0x38] sm:$0xf]
      %v246 = vld [vmem:[%s1 + $0x3c] sm:$0xf]
      %v247 = vld [vmem:[%s2] sm:$0x1]
      %v249 = vlaneseq
      %v250 = vshrl.u32 %v249, 7
      %v251 = vsub.s32 0, %v250
      %v252 = vrot.slane %v247, %v251
      %v256 = vunpack.c.l.b16 %v229
      %v257 = vunpack.c.l.b16 %v230
      %v258 = vpack.c.b16 %v257, %v256
      %v276 = vunpack.c.l.b16 %v231
      %v277 = vunpack.c.l.b16 %v232
      %v278 = vunpack.c.l.b16 %v233
      %v279 = vunpack.c.l.b16 %v234
      %v280 = vunpack.c.l.b16 %v235
      %v281 = vunpack.c.l.b16 %v236
      %v282 = vunpack.c.l.b16 %v237
      %v283 = vunpack.c.l.b16 %v238
      %v284 = vunpack.c.l.b16 %v239
      %v285 = vunpack.c.l.b16 %v240
      %v286 = vunpack.c.l.b16 %v241
      %v287 = vunpack.c.l.b16 %v242
      %v288 = vunpack.c.l.b16 %v243
      %v289 = vunpack.c.l.b16 %v244
      %v290 = vunpack.c.l.b16 %v245
      %v291 = vunpack.c.l.b16 %v246
      %v292 = vpack.c.b16 %v277, %v276
      %v293 = vpack.c.b16 %v279, %v278
      %v294 = vpack.c.b16 %v281, %v280
      %v295 = vpack.c.b16 %v283, %v282
      %v296 = vpack.c.b16 %v285, %v284
      %v297 = vpack.c.b16 %v287, %v286
      %v298 = vpack.c.b16 %v289, %v288
      %v299 = vpack.c.b16 %v291, %v290
      %308 = vmatprep.subr.bf16.mxu0 0
      %309 = vmatpush1.bf16.msra.mxu0 %v299
      %310 = vmatprep.subr.bf16.mxu0 0
      %311 = vmatpush1.bf16.msra.mxu0 %v298
      %312 = vmatprep.subr.bf16.mxu0 0
      %313 = vmatpush1.bf16.msra.mxu0 %v297
      %314 = vmatprep.subr.bf16.mxu0 0
      %315 = vmatpush1.bf16.msra.mxu0 %v296
      %316 = vmatprep.subr.bf16.mxu0 0
      %317 = vmatpush1.bf16.msra.mxu0 %v295
      %318 = vmatprep.subr.bf16.mxu0 0
      %319 = vmatpush1.bf16.msra.mxu0 %v294
      %320 = vmatprep.subr.bf16.mxu0 0
      %321 = vmatpush1.bf16.msra.mxu0 %v293
      %322 = vmatprep.subr.bf16.mxu0 0
      %323 = vmatpush1.bf16.msra.mxu0 %v292
      %324 = vmatprep.subr.bf16.mxu0 0
      %325 = vmatpush2.bf16.msra.mxu0 0
      %326 = vmatprep.subr.bf16.mxu0 0
      %327 = vmatpush2.bf16.msra.mxu0 0
      %328 = vmatprep.subr.bf16.mxu0 0
      %329 = vmatpush2.bf16.msra.mxu0 0
      %330 = vmatprep.subr.bf16.mxu0 0
      %331 = vmatpush2.bf16.msra.mxu0 0
      %332 = vmatprep.subr.bf16.mxu0 0
      %333 = vmatpush2.bf16.msra.mxu0 0
      %334 = vmatprep.subr.bf16.mxu0 0
      %335 = vmatpush2.bf16.msra.mxu0 0
      %336 = vmatprep.subr.bf16.mxu0 0
      %337 = vmatpush2.bf16.msra.mxu0 0
      %338 = vmatprep.subr.bf16.mxu0 0
      %339 = vmatpush2.bf16.msra.mxu0 0
      %340 = vmatprep.mubr.bf16.mxu0 0
      %341 = vmatmul.mubr.bf16.gmra.mxu0 %v258
      %v342 = vpop.f32.mrf.mxu0
      %v343 = vadd.f32 %v252, %v342
      %v344 = vpop.f32.mrf.mxu0
      %v345 = vpop.f32.mrf.mxu0
      %v346 = vadd.f32 %v252, %v345
      %v347 = vpop.f32.mrf.mxu0
      %348 = vdwg.mxu0
      %v349 = vtanh.pop %v343
      %v350 = vtanh.pop %v346
      %v351 = vpack.c.bf16 %v350, %v349
      %v352 = vld [vmem:[%s3] sm:$0xf]
      %v353 = vld [vmem:[%s3 + $0x4] sm:$0xf]
      %v354 = vld [vmem:[%s3 + $0x8] sm:$0xf]
      %v355 = vld [vmem:[%s3 + $0xc] sm:$0xf]
      %v356 = vld [vmem:[%s3 + $0x10] sm:$0xf]
      %v357 = vld [vmem:[%s3 + $0x14] sm:$0xf]
      %v358 = vld [vmem:[%s3 + $0x18] sm:$0xf]
      %v359 = vld [vmem:[%s3 + $0x1c] sm:$0xf]
      %v360 = vld [vmem:[%s3 + $0x20] sm:$0xf]
      %v361 = vld [vmem:[%s3 + $0x24] sm:$0xf]
      %v362 = vld [vmem:[%s3 + $0x28] sm:$0xf]
      %v363 = vld [vmem:[%s3 + $0x2c] sm:$0xf]
      %v364 = vld [vmem:[%s3 + $0x30] sm:$0xf]
      %v365 = vld [vmem:[%s3 + $0x34] sm:$0xf]
      %v366 = vld [vmem:[%s3 + $0x38] sm:$0xf]
      %v367 = vld [vmem:[%s3 + $0x3c] sm:$0xf]
      %v368 = vld [vmem:[%s4] sm:$0x1]
      %v370 = vlaneseq
      %v371 = vshrl.u32 %v370, 7
      %v372 = vsub.s32 0, %v371
      %v373 = vrot.slane %v368, %v372
      %v391 = vunpack.c.l.b16 %v352
      %v392 = vunpack.c.l.b16 %v353
      %v393 = vunpack.c.l.b16 %v354
      %v394 = vunpack.c.l.b16 %v355
      %v395 = vunpack.c.l.b16 %v356
      %v396 = vunpack.c.l.b16 %v357
      %v397 = vunpack.c.l.b16 %v358
      %v398 = vunpack.c.l.b16 %v359
      %v399 = vunpack.c.l.b16 %v360
      %v400 = vunpack.c.l.b16 %v361
      %v401 = vunpack.c.l.b16 %v362
      %v402 = vunpack.c.l.b16 %v363
      %v403 = vunpack.c.l.b16 %v364
      %v404 = vunpack.c.l.b16 %v365
      %v405 = vunpack.c.l.b16 %v366
      %v406 = vunpack.c.l.b16 %v367
      %v407 = vpack.c.b16 %v392, %v391
      %v408 = vpack.c.b16 %v394, %v393
      %v409 = vpack.c.b16 %v396, %v395
      %v410 = vpack.c.b16 %v398, %v397
      %v411 = vpack.c.b16 %v400, %v399
      %v412 = vpack.c.b16 %v402, %v401
      %v413 = vpack.c.b16 %v404, %v403
      %v414 = vpack.c.b16 %v406, %v405
      %423 = vmatprep.subr.bf16.mxu0 0
      %424 = vmatpush1.bf16.msra.mxu0 %v414
      %425 = vmatprep.subr.bf16.mxu0 0
      %426 = vmatpush1.bf16.msra.mxu0 %v413
      %427 = vmatprep.subr.bf16.mxu0 0
      %428 = vmatpush1.bf16.msra.mxu0 %v412
      %429 = vmatprep.subr.bf16.mxu0 0
      %430 = vmatpush1.bf16.msra.mxu0 %v411
      %431 = vmatprep.subr.bf16.mxu0 0
      %432 = vmatpush1.bf16.msra.mxu0 %v410
      %433 = vmatprep.subr.bf16.mxu0 0
      %434 = vmatpush1.bf16.msra.mxu0 %v409
      %435 = vmatprep.subr.bf16.mxu0 0
      %436 = vmatpush1.bf16.msra.mxu0 %v408
      %437 = vmatprep.subr.bf16.mxu0 0
      %438 = vmatpush1.bf16.msra.mxu0 %v407
      %439 = vmatprep.subr.bf16.mxu0 0
      %440 = vmatpush2.bf16.msra.mxu0 0
      %441 = vmatprep.subr.bf16.mxu0 0
      %442 = vmatpush2.bf16.msra.mxu0 0
      %443 = vmatprep.subr.bf16.mxu0 0
      %444 = vmatpush2.bf16.msra.mxu0 0
      %445 = vmatprep.subr.bf16.mxu0 0
      %446 = vmatpush2.bf16.msra.mxu0 0
      %447 = vmatprep.subr.bf16.mxu0 0
      %448 = vmatpush2.bf16.msra.mxu0 0
      %449 = vmatprep.subr.bf16.mxu0 0
      %450 = vmatpush2.bf16.msra.mxu0 0
      %451 = vmatprep.subr.bf16.mxu0 0
      %452 = vmatpush2.bf16.msra.mxu0 0
      %453 = vmatprep.subr.bf16.mxu0 0
      %454 = vmatpush2.bf16.msra.mxu0 0
      %455 = vmatprep.mubr.bf16.mxu0 0
      %456 = vmatmul.mubr.bf16.gmra.mxu0 %v351
      %v457 = vpop.f32.mrf.mxu0
      %v458 = vadd.f32 %v373, %v457
      %v459 = vpop.f32.mrf.mxu0
      %v460 = vpop.f32.mrf.mxu0
      %v461 = vadd.f32 %v373, %v460
      %v462 = vpop.f32.mrf.mxu0
      %463 = vdwg.mxu0
      %464 = vmax.xlane.f32.xlu0 %v458
      %v465 = vpop.xlane.xlu0 %464
      %466 = vmax.xlane.f32.xlu0 %v461
      %v467 = vpop.xlane.xlu0 %466
      %v468 = vsub.f32 %v458, %v465
      %v469 = vsub.f32 %v461, %v467
      %v470 = vmul.f32 %v468, 1.442695
      %v471 = vpow.pop %v470
      %v472 = vmul.f32 %v469, 1.442695
      %v473 = vpow.pop %v472
      %474 = vadd.xlane.f32.xlu0 %v471
      %v475 = vpop.xlane.xlu0 %474
      %476 = vadd.xlane.f32.xlu0 %v473
      %v477 = vpop.xlane.xlu0 %476
      %v478 = vrcp.pop %v475
      %v479 = vrcp.pop %v477
      %v480 = vmul.f32 %v471, %v478
      %v481 = vmul.f32 %v473, %v479
      %482 = vst [vmem:[%s226] sm:$0xff] %v480
      %483 = vst [vmem:[%s226 + $0x8] sm:$0xff] %v481
      %s484 = smul.u32 2, %s16
      %p485 = scmp.lt.s32.totalorder %s484, 3
      %s486 = scalar_select %p485, %s484, 3
      %s487 = smul.addr %s486, 8
      %s488 = scalar_lea.vmem %s5, %s487
      // Predicated region
      $region41: #{bert_classification_head.1} parent=39 // pred_check
        %p489 = pneg %p144
      $region42: #{bert_classification_head.1} parent=39 // pred_check_branch
        %491 = sbr.rel (%p489) target = $region44
      $region43: #{bert_classification_head.1} parent=39 // pred_region
        %s492 = smul.u32 2, %s16
      $region44: #{bert_classification_head.1} parent=39 // pred_fallthru
        _
    $region40: #{bert_classification_head.1} parent=5 // pred_fallthru
      _
    %p493 = scmp.le.s32.totalorder 2, %s11
    // Predicated region
    $region45: #{bert_classification_head.1} parent=5 // pred_check
      %p494 = pneg %p493
    $region46: #{bert_classification_head.1} parent=5 // pred_check_branch
      %496 = sbr.rel (%p494) target = $region48
    $region47: #{bert_classification_head.1} parent=5 // pred_region
      %s497 = ssub.s32 %s11, 2
      // Predicated region
      $region49: #{bert_classification_head.1} parent=47 // pred_check
        %p498 = pneg %p150
      $region50: #{bert_classification_head.1} parent=47 // pred_check_branch
        %500 = sbr.rel (%p498) target = $region52
      $region51: #{bert_classification_head.1} parent=47 // pred_region
        %s501 = smul.u32 2, %s17
        %p502 = scmp.lt.s32.totalorder %s501, 3
        %s503 = scalar_select %p502, %s501, 3
        %s504 = smul.addr %s503, 8
        %s505 = scalar_lea.vmem %s5, %s504
      $region52: #{bert_classification_head.1} parent=47 // pred_fallthru
        _
    $region48: #{bert_classification_head.1} parent=5 // pred_fallthru
      _
  $region6: #{bert_classification_head.1} parent=0 // loop_footer
    %s15 = sadd.s32 1, %s11
  $region7: #{bert_classification_head.1} parent=0 // loop_footer_branch
    %10 = sbr.rel target = $region3
  $region8: #{bert_classification_head.1} parent=0 // loop_exit
    _

</llo_original>
